<compile_context>
chip_gen: v7x
topology: tpu7x:2x2x1
jax: 0.10.0
libtpu: 0.0.40
codegen_flags: <defaults>
</compile_context>

<pallas_src>
import jax
import jax.numpy as jnp
from jax import lax
from jax.experimental import pallas as pl
from jax.experimental.pallas import tpu as pltpu


OUT_W = 128      # lane-dense packed-output width
MAX_TB = 4096    # max batch-tile rows (output double-buffer ~4 MB, VMEM-safe on v5e/v6e/v7x)


def _dhnn_fused_kernel(x_ref, w1t_ref, w2t_ref, w2_ref, wo_ref, wg_ref, c_ref,
                       out_ref):
    """Fused D+H MLP forward + analytic input-gradients, packed output slab."""
    f32 = jnp.float32
    dn = (((1,), (0,)), ((), ()))          # plain A @ B contraction

    x = x_ref[...]                          # [TB, Din]
    w1t = w1t_ref[...]                      # [Din, 2H1]   stacked, pre-transposed
    w2t = w2t_ref[...]                      # [2H1, 2H2]   block-diag, forward orientation
    w2 = w2_ref[...]                        # [2H2, 2H1]   block-diag, backward orientation
    wo = wo_ref[...]                        # [2H2, OUT_W] cols 0/1 carry wo_d / wo_h
    wg = wg_ref[...]                        # [2H1, OUT_W] gradient + glue, shifted by 2

    h1x2 = w1t.shape[1]
    h2x2 = w2t.shape[1]
    b1 = c_ref[0:1, :h1x2]                  # [1, 2H1]
    b2 = c_ref[1:2, :h2x2]                  # [1, 2H2]
    seed = c_ref[2:3, :h2x2]                # [1, 2H2] = [wo_d | wo_h]
    bout = c_ref[3:4, :]                    # [1, OUT_W] output bias (cols 0/1), rest 0

    # ---- fused forward (both nets at once) ----
    z1 = lax.dot_general(x, w1t, dn, preferred_element_type=f32) + b1      # [TB, 2H1]
    e1 = jnp.exp(jnp.minimum(z1, 0.0))      # reused for ELU value & ELU', inf-safe
    a1 = jnp.where(z1 > 0, z1, e1 - 1.0)
    d1 = jnp.where(z1 > 0, 1.0, e1)

    z2 = lax.dot_general(a1, w2t, dn, preferred_element_type=f32) + b2     # [TB, 2H2]
    e2 = jnp.exp(jnp.minimum(z2, 0.0))
    a2 = jnp.where(z2 > 0, z2, e2 - 1.0)
    d2 = jnp.where(z2 > 0, 1.0, e2)

    # ---- fused backward: gradients of the two nets stay separated in column
    #      blocks because W2 is block-diagonal ----
    g2 = seed * d2                                                         # [TB, 2H2]
    g1 = lax.dot_general(g2, w2, dn, preferred_element_type=f32) * d1      # [TB, 2H1]

    # ---- packed lane-dense output in one unmasked 128-wide store ----
    # wo carries [D_hat, H_hat] into cols 0/1; wg carries xdot_hat into cols
    # 2:2+Din and grad_D into cols 2+Din:2+2Din; bout adds the output biases.
    out_ref[...] = (lax.dot_general(a2, wo, dn, preferred_element_type=f32)
                    + lax.dot_general(g1, wg, dn, preferred_element_type=f32)
                    + bout)


# ------------------------- parameter packing -------------------------

def pack_dhnn_params(params_d, params_h):
    """Fuse / block-diagonalize the two nets' parameters; fold output bias and
    the concat([dHdp, -dHdq]) + grad_D glue into padded [*, OUT_W] weights."""
    w1d, b1d, w2d, b2d, wod, bod = params_d
    w1h, b1h, w2h, b2h, woh, boh = params_h
    f32 = jnp.float32
    H1, Din = w1d.shape
    H2 = w2d.shape[0]
    half = Din // 2
    assert 2 * max(H1, H2) <= OUT_W and 2 + 2 * Din <= OUT_W

    # Layer 1: stacked D+H, pre-transposed to [in, out]
    w1t = jnp.concatenate([w1d, w1h], axis=0).T                     # [Din, 2H1]

    # Layer 2: block-diagonal, both orientations (backward uses the original)
    w2 = jnp.zeros((2 * H2, 2 * H1), f32)
    w2 = w2.at[:H2, :H1].set(w2d).at[H2:, H1:].set(w2h)             # [2H2, 2H1]
    w2t = w2.T                                                      # [2H1, 2H2]

    # Output layer, padded to OUT_W: col 0 <- wo_d acting on a2_d, col 1 <- wo_h on a2_h
    wo_pad = jnp.zeros((2 * H2, OUT_W), f32)
    wo_pad = wo_pad.at[:H2, 0].set(wod[0]).at[H2:, 1].set(woh[0])

    # Gradient/glue weights, shifted right by 2 so the slab needs no concat:
    #   cols 2:2+Din       -> xdot_hat = grad_D + cat([dHdp, -dHdq])
    #   cols 2+Din:2+2Din  -> grad_D
    w1h_rot = jnp.concatenate([w1h[:, half:], -w1h[:, :half]], axis=1)   # [H1, Din]
    wg_pad = jnp.zeros((2 * H1, OUT_W), f32)
    wg_pad = wg_pad.at[:H1, 2:2 + Din].set(w1d)
    wg_pad = wg_pad.at[H1:, 2:2 + Din].set(w1h_rot)
    wg_pad = wg_pad.at[:H1, 2 + Din:2 + 2 * Din].set(w1d)

    # Consolidated small constants: rows = b1, b2, backward seed, output bias
    consts = jnp.zeros((4, OUT_W), f32)
    consts = consts.at[0, :2 * H1].set(jnp.concatenate([b1d, b1h], axis=1)[0])
    consts = consts.at[1, :2 * H2].set(jnp.concatenate([b2d, b2h], axis=1)[0])
    consts = consts.at[2, :2 * H2].set(jnp.concatenate([wod, woh], axis=1)[0])
    consts = consts.at[3, 0].set(bod[0, 0]).at[3, 1].set(boh[0, 0])

    return (w1t, w2t, w2, wo_pad, wg_pad, consts)


# ------------------------------ wrapper --------------------------------

def dhnn_forward(x, params_d, params_h, as_separate=False):
    """DHNN.forward(x, t=None) — single fused Pallas kernel call."""
    # TODO(synk): the `t is not None` path (torch.cat([x, t], -1)) is not implemented.
    B, Din = x.shape
    packed = pack_dhnn_params(params_d, params_h)

    # Batch tiling: large tiles (per-step overhead ~0.35 us dominates small tiles);
    # for B > MAX_TB keep the grid length even so both v7x TensorCores get work.
    if B <= MAX_TB:
        tb = B
    else:
        grid_n = pl.cdiv(B, MAX_TB)
        if grid_n % 2 == 1:
            grid_n += 1
        tb = -(-B // grid_n)
        tb = ((tb + 7) // 8) * 8            # sublane multiple
    grid_n = pl.cdiv(B, tb)
    Bp = grid_n * tb
    x_in = x if Bp == B else jnp.pad(x, ((0, Bp - B), (0, 0)))

    slab = pl.pallas_call(
        _dhnn_fused_kernel,
        out_shape=jax.ShapeDtypeStruct((Bp, OUT_W), jnp.float32),
        grid_spec=pltpu.PrefetchScalarGridSpec(
            num_scalar_prefetch=0,
            grid=(grid_n,),
            in_specs=[pl.BlockSpec((tb, Din), lambda i: (i, 0))]          # x, tiled over batch
                     + [pl.BlockSpec(p.shape, lambda i: (0, 0))           # fused params, resident
                        for p in packed],
            out_specs=pl.BlockSpec((tb, OUT_W), lambda i: (i, 0)),        # lane-dense slab
        ),
        compiler_params=pltpu.CompilerParams(
            dimension_semantics=("parallel",)),
    )(x_in, *packed)

    slab = slab[:B]
    D_hat = slab[:, 0:1]
    H_hat = slab[:, 1:2]
    xdot_hat = slab[:, 2:2 + Din]
    grad_D = slab[:, 2 + Din:2 + 2 * Din]

    if as_separate:
        # Xdot_irr == grad_D (split + re-concat is identity); Xdot_rot = xdot - irr
        return grad_D, xdot_hat - grad_D
    return {"xdot_hat": xdot_hat, "H_hat": H_hat, "D_hat": D_hat}


# ------------------------- parameter construction -------------------------

def init_mlp_params(key, input_dim, hidden_dims, output_dim):
    """Deterministic init (uniform, PyTorch-Linear-like fan_in scaling)."""
    dims = [input_dim] + list(hidden_dims) + [output_dim]
    params = []
    for i in range(len(dims) - 1):
        fan_in, fan_out = dims[i], dims[i + 1]
        key, kw, kb = jax.random.split(key, 3)
        bound = 1.0 / jnp.sqrt(fan_in)
        w = jax.random.uniform(kw, (fan_out, fan_in), jnp.float32, -bound, bound)
        b = jax.random.uniform(kb, (1, fan_out), jnp.float32, -bound, bound)
        params += [w, b]
    return tuple(params)


# ------------------------------ reference --------------------------------

def _elu_ref(z):
    return jnp.where(z > 0, z, jnp.exp(z) - 1.0)


def _mlp_ref(x, params):
    w1, b1, w2, b2, wo, bo = params
    a1 = _elu_ref(x @ w1.T + b1[0])
    a2 = _elu_ref(a1 @ w2.T + b2[0])
    return a2 @ wo.T + bo[0]


def _dhnn_ref(x, params_d, params_h):
    D_hat = _mlp_ref(x, params_d)
    H_hat = _mlp_ref(x, params_h)
    irr = jax.grad(lambda xx: _mlp_ref(xx, params_d).sum())(x)
    rot = jax.grad(lambda xx: _mlp_ref(xx, params_h).sum())(x)
    half = rot.shape[-1] // 2
    dHdq, dHdp = rot[:, :half], rot[:, half:]
    return {"xdot_hat": irr + jnp.concatenate([dHdp, -dHdq], axis=-1),
            "H_hat": H_hat, "D_hat": D_hat, "irr": irr,
            "rot": jnp.concatenate([dHdp, -dHdq], axis=-1)}


# --------------------------------- main -----------------------------------

if __name__ == "__main__":
    key = jax.random.PRNGKey(0)

    B = 16            # batch
    INPUT_DIM = 4     # state dim (must be even: [q, p])
    HIDDEN = [32, 32]
    OUTPUT_DIM = 1    # forced by DHNN.__init__

    key, kx, kd, kh = jax.random.split(key, 4)
    x = jax.random.normal(kx, (B, INPUT_DIM), jnp.float32)
    params_d = init_mlp_params(kd, INPUT_DIM, HIDDEN, OUTPUT_DIM)
    params_h = init_mlp_params(kh, INPUT_DIM, HIDDEN, OUTPUT_DIM)

    out = dhnn_forward(x, params_d, params_h)
    jax.block_until_ready(out)

    ref = _dhnn_ref(x, params_d, params_h)
    for k in ("xdot_hat", "H_hat", "D_hat"):
        assert jnp.allclose(out[k], ref[k], atol=2e-5, rtol=2e-5), k

    irr, rot = dhnn_forward(x, params_d, params_h, as_separate=True)
    jax.block_until_ready((irr, rot))
    assert jnp.allclose(irr, ref["irr"], atol=2e-5, rtol=2e-5)
    assert jnp.allclose(rot, ref["rot"], atol=2e-5, rtol=2e-5)

    print("KERNEL_OK")
</pallas_src>

<mosaic_0001>
module attributes {stable_mosaic.version = 11 : i64} {
  func.func @_dhnn_fused_kernel(%arg0: i32, %arg1: memref<16x4xf32, #tpu.memory_space<vmem>>, %arg2: memref<4x64xf32, #tpu.memory_space<vmem>>, %arg3: memref<64x64xf32, #tpu.memory_space<vmem>>, %arg4: memref<64x64xf32, #tpu.memory_space<vmem>>, %arg5: memref<64x128xf32, #tpu.memory_space<vmem>>, %arg6: memref<64x128xf32, #tpu.memory_space<vmem>>, %arg7: memref<4x128xf32, #tpu.memory_space<vmem>>, %arg8: memref<16x128xf32, #tpu.memory_space<vmem>>) attributes {dimension_semantics = [#tpu.dimension_semantics<parallel>], iteration_bounds = array<i64: 1>, scalar_prefetch = 0 : i64, scratch_operands = 0 : i64, tpu.core_type = #tpu.core_type<tc>, window_params = [{transform_indices = @transform_0, window_bounds = array<i64: 16, 4>}, {pipeline_mode = #tpu.pipeline_mode<synchronous>, transform_indices = @transform_1, window_bounds = array<i64: 4, 64>}, {pipeline_mode = #tpu.pipeline_mode<synchronous>, transform_indices = @transform_2, window_bounds = array<i64: 64, 64>}, {pipeline_mode = #tpu.pipeline_mode<synchronous>, transform_indices = @transform_3, window_bounds = array<i64: 64, 64>}, {pipeline_mode = #tpu.pipeline_mode<synchronous>, transform_indices = @transform_4, window_bounds = array<i64: 64, 128>}, {pipeline_mode = #tpu.pipeline_mode<synchronous>, transform_indices = @transform_5, window_bounds = array<i64: 64, 128>}, {pipeline_mode = #tpu.pipeline_mode<synchronous>, transform_indices = @transform_6, window_bounds = array<i64: 4, 128>}, {transform_indices = @transform_7, window_bounds = array<i64: 16, 128>}]} {
    %c0 = arith.constant 0 : index
    %c0_0 = arith.constant 0 : index
    %0 = vector.load %arg1[%c0, %c0_0] : memref<16x4xf32, #tpu.memory_space<vmem>>, vector<16x4xf32>
    %c0_1 = arith.constant 0 : index
    %c0_2 = arith.constant 0 : index
    %1 = vector.load %arg2[%c0_1, %c0_2] : memref<4x64xf32, #tpu.memory_space<vmem>>, vector<4x64xf32>
    %c0_3 = arith.constant 0 : index
    %c0_4 = arith.constant 0 : index
    %2 = vector.load %arg3[%c0_3, %c0_4] : memref<64x64xf32, #tpu.memory_space<vmem>>, vector<64x64xf32>
    %c0_5 = arith.constant 0 : index
    %c0_6 = arith.constant 0 : index
    %3 = vector.load %arg4[%c0_5, %c0_6] : memref<64x64xf32, #tpu.memory_space<vmem>>, vector<64x64xf32>
    %c0_7 = arith.constant 0 : index
    %c0_8 = arith.constant 0 : index
    %4 = vector.load %arg5[%c0_7, %c0_8] : memref<64x128xf32, #tpu.memory_space<vmem>>, vector<64x128xf32>
    %c0_9 = arith.constant 0 : index
    %c0_10 = arith.constant 0 : index
    %5 = vector.load %arg6[%c0_9, %c0_10] : memref<64x128xf32, #tpu.memory_space<vmem>>, vector<64x128xf32>
    %c0_11 = arith.constant 0 : index
    %c0_12 = arith.constant 0 : index
    %6 = vector.load %arg7[%c0_11, %c0_12] : memref<4x128xf32, #tpu.memory_space<vmem>>, vector<1x64xf32>
    %c1 = arith.constant 1 : index
    %c0_13 = arith.constant 0 : index
    %7 = vector.load %arg7[%c1, %c0_13] : memref<4x128xf32, #tpu.memory_space<vmem>>, vector<1x64xf32>
    %c2 = arith.constant 2 : index
    %c0_14 = arith.constant 0 : index
    %8 = vector.load %arg7[%c2, %c0_14] : memref<4x128xf32, #tpu.memory_space<vmem>>, vector<1x64xf32>
    %c3 = arith.constant 3 : index
    %c0_15 = arith.constant 0 : index
    %9 = vector.load %arg7[%c3, %c0_15] : memref<4x128xf32, #tpu.memory_space<vmem>>, vector<1x128xf32>
    %cst = arith.constant dense<0.000000e+00> : vector<16x64xf32>
    %10 = tpu.matmul %0, %1, %cst {dimension_numbers = #tpu.dot_dimension_numbers<[1], [0], [0], [1], [0, 0, 1, 1], [], []>} : vector<16x4xf32>, vector<4x64xf32>, vector<16x64xf32> -> vector<16x64xf32>
    %11 = vector.broadcast %6 : vector<1x64xf32> to vector<16x64xf32>
    %12 = arith.addf %10, %11 : vector<16x64xf32>
    %cst_16 = arith.constant 0.000000e+00 : f32
    %13 = vector.broadcast %cst_16 : f32 to vector<16x64xf32>
    %14 = arith.minimumf %12, %13 : vector<16x64xf32>
    %15 = math.exp %14 : vector<16x64xf32>
    %cst_17 = arith.constant 0.000000e+00 : f32
    %16 = vector.broadcast %cst_17 : f32 to vector<16x64xf32>
    %17 = arith.cmpf ogt, %12, %16 : vector<16x64xf32>
    %cst_18 = arith.constant 1.000000e+00 : f32
    %18 = vector.broadcast %cst_18 : f32 to vector<16x64xf32>
    %19 = arith.subf %15, %18 : vector<16x64xf32>
    %20 = arith.select %17, %12, %19 : vector<16x64xi1>, vector<16x64xf32>
    %cst_19 = arith.constant 0.000000e+00 : f32
    %21 = vector.broadcast %cst_19 : f32 to vector<16x64xf32>
    %22 = arith.cmpf ogt, %12, %21 : vector<16x64xf32>
    %cst_20 = arith.constant 1.000000e+00 : f32
    %23 = vector.broadcast %cst_20 : f32 to vector<16x64xf32>
    %24 = arith.select %22, %23, %15 : vector<16x64xi1>, vector<16x64xf32>
    %cst_21 = arith.constant dense<0.000000e+00> : vector<16x64xf32>
    %25 = tpu.matmul %20, %2, %cst_21 {dimension_numbers = #tpu.dot_dimension_numbers<[1], [0], [0], [1], [0, 0, 1, 1], [], []>} : vector<16x64xf32>, vector<64x64xf32>, vector<16x64xf32> -> vector<16x64xf32>
    %26 = vector.broadcast %7 : vector<1x64xf32> to vector<16x64xf32>
    %27 = arith.addf %25, %26 : vector<16x64xf32>
    %cst_22 = arith.constant 0.000000e+00 : f32
    %28 = vector.broadcast %cst_22 : f32 to vector<16x64xf32>
    %29 = arith.minimumf %27, %28 : vector<16x64xf32>
    %30 = math.exp %29 : vector<16x64xf32>
    %cst_23 = arith.constant 0.000000e+00 : f32
    %31 = vector.broadcast %cst_23 : f32 to vector<16x64xf32>
    %32 = arith.cmpf ogt, %27, %31 : vector<16x64xf32>
    %cst_24 = arith.constant 1.000000e+00 : f32
    %33 = vector.broadcast %cst_24 : f32 to vector<16x64xf32>
    %34 = arith.subf %30, %33 : vector<16x64xf32>
    %35 = arith.select %32, %27, %34 : vector<16x64xi1>, vector<16x64xf32>
    %cst_25 = arith.constant 0.000000e+00 : f32
    %36 = vector.broadcast %cst_25 : f32 to vector<16x64xf32>
    %37 = arith.cmpf ogt, %27, %36 : vector<16x64xf32>
    %cst_26 = arith.constant 1.000000e+00 : f32
    %38 = vector.broadcast %cst_26 : f32 to vector<16x64xf32>
    %39 = arith.select %37, %38, %30 : vector<16x64xi1>, vector<16x64xf32>
    %40 = vector.broadcast %8 : vector<1x64xf32> to vector<16x64xf32>
    %41 = arith.mulf %40, %39 : vector<16x64xf32>
    %cst_27 = arith.constant dense<0.000000e+00> : vector<16x64xf32>
    %42 = tpu.matmul %41, %3, %cst_27 {dimension_numbers = #tpu.dot_dimension_numbers<[1], [0], [0], [1], [0, 0, 1, 1], [], []>} : vector<16x64xf32>, vector<64x64xf32>, vector<16x64xf32> -> vector<16x64xf32>
    %43 = arith.mulf %42, %24 : vector<16x64xf32>
    %cst_28 = arith.constant dense<0.000000e+00> : vector<16x128xf32>
    %44 = tpu.matmul %35, %4, %cst_28 {dimension_numbers = #tpu.dot_dimension_numbers<[1], [0], [0], [1], [0, 0, 1, 1], [], []>} : vector<16x64xf32>, vector<64x128xf32>, vector<16x128xf32> -> vector<16x128xf32>
    %cst_29 = arith.constant dense<0.000000e+00> : vector<16x128xf32>
    %45 = tpu.matmul %43, %5, %cst_29 {dimension_numbers = #tpu.dot_dimension_numbers<[1], [0], [0], [1], [0, 0, 1, 1], [], []>} : vector<16x64xf32>, vector<64x128xf32>, vector<16x128xf32> -> vector<16x128xf32>
    %46 = arith.addf %44, %45 : vector<16x128xf32>
    %47 = vector.broadcast %9 : vector<1x128xf32> to vector<16x128xf32>
    %48 = arith.addf %46, %47 : vector<16x128xf32>
    %c0_30 = arith.constant 0 : index
    %c0_31 = arith.constant 0 : index
    %49 = vector.load %arg8[%c0_30, %c0_31] : memref<16x128xf32, #tpu.memory_space<vmem>>, vector<16x128xf32>
    tpu.vector_store %arg8[%c0_30, %c0_31], %48 {strides = array<i32>} : memref<16x128xf32, #tpu.memory_space<vmem>>, vector<16x128xf32>,
    return
  }
  func.func @transform_0(%arg0: i32) -> (i32, i32) {
    %c0_i32 = arith.constant 0 : i32
    %c0_i32_0 = arith.constant 0 : i32
    return %arg0, %c0_i32 : i32, i32
  }
  func.func @transform_1(%arg0: i32) -> (i32, i32) {
    %c0_i32 = arith.constant 0 : i32
    %c0_i32_0 = arith.constant 0 : i32
    %c0_i32_1 = arith.constant 0 : i32
    return %c0_i32, %c0_i32_0 : i32, i32
  }
  func.func @transform_2(%arg0: i32) -> (i32, i32) {
    %c0_i32 = arith.constant 0 : i32
    %c0_i32_0 = arith.constant 0 : i32
    %c0_i32_1 = arith.constant 0 : i32
    return %c0_i32, %c0_i32_0 : i32, i32
  }
  func.func @transform_3(%arg0: i32) -> (i32, i32) {
    %c0_i32 = arith.constant 0 : i32
    %c0_i32_0 = arith.constant 0 : i32
    %c0_i32_1 = arith.constant 0 : i32
    return %c0_i32, %c0_i32_0 : i32, i32
  }
  func.func @transform_4(%arg0: i32) -> (i32, i32) {
    %c0_i32 = arith.constant 0 : i32
    %c0_i32_0 = arith.constant 0 : i32
    %c0_i32_1 = arith.constant 0 : i32
    return %c0_i32, %c0_i32_0 : i32, i32
  }
  func.func @transform_5(%arg0: i32) -> (i32, i32) {
    %c0_i32 = arith.constant 0 : i32
    %c0_i32_0 = arith.constant 0 : i32
    %c0_i32_1 = arith.constant 0 : i32
    return %c0_i32, %c0_i32_0 : i32, i32
  }
  func.func @transform_6(%arg0: i32) -> (i32, i32) {
    %c0_i32 = arith.constant 0 : i32
    %c0_i32_0 = arith.constant 0 : i32
    %c0_i32_1 = arith.constant 0 : i32
    return %c0_i32, %c0_i32_0 : i32, i32
  }
  func.func @transform_7(%arg0: i32) -> (i32, i32) {
    %c0_i32 = arith.constant 0 : i32
    %c0_i32_0 = arith.constant 0 : i32
    return %arg0, %c0_i32 : i32, i32
  }
}

</mosaic_0001>

<llo_original>
// kernel: tpu_custom_call.1
$region0: #{tpu_custom_call.1}
  #allocation0 [shape = 'u32[]', space=smem, size = 0x4, offset = 0x4, fixed_abs, tag = 'smem constant byte address 0x4 - core index']
  #allocation1 [shape = 'u32[144,128]{1,0:T(1,128)}', space=vmem, size = 0x12000, scoped, tag = 'internal scratch']
  %s0 = inlined_call_operand.vmem [shape: f32[16,4], index: 0, kind: input, shape index: {}]
  %s1 = inlined_call_operand.vmem [shape: f32[4,64], index: 1, kind: input, shape index: {}]
  %s2 = inlined_call_operand.hbm [shape: f32[64,64], index: 2, kind: input, shape index: {}]
  %s3 = inlined_call_operand.hbm [shape: f32[64,64], index: 3, kind: input, shape index: {}]
  %s4 = inlined_call_operand.hbm [shape: f32[64,128], index: 4, kind: input, shape index: {}]
  %s5 = inlined_call_operand.hbm [shape: f32[64,128], index: 5, kind: input, shape index: {}]
  %s6 = inlined_call_operand.vmem [shape: f32[4,128], index: 6, kind: input, shape index: {}]
  %s7 = inlined_call_operand.hbm [shape: f32[16,128], index: 7, kind: output, shape index: {}]
  %s8 = sld [smem:[#allocation0]]
  $region54: #{tpu_custom_call.1} parent=0
    _
  %s10 = ssub.s32 1, %s8
  %s11 = scalar_select 0, %s10, %s8
  $region1: #{tpu_custom_call.1} parent=0
    #allocation2 [shape = 'u8[32768]{0}', space=vmem, size = 0x8000, scoped, tag = 'input window, operand 2, single buffered']
    #allocation3 [shape = 's32[1]{0}', space=sflag, size = 0x4, scoped, tag = 'scoped memory for tpu_custom_call.1']
    #allocation4 [shape = 's32[1]{0}', space=sflag, size = 0x4, scoped, tag = 'scoped memory for tpu_custom_call.1']
    #allocation5 [shape = 'u8[32768]{0}', space=vmem, size = 0x8000, scoped, tag = 'input window, operand 3, single buffered']
    #allocation6 [shape = 's32[1]{0}', space=sflag, size = 0x4, scoped, tag = 'scoped memory for tpu_custom_call.1']
    #allocation7 [shape = 'u8[32768]{0}', space=vmem, size = 0x8000, scoped, tag = 'input window, operand 4, single buffered']
    #allocation8 [shape = 'u8[32768]{0}', space=vmem, size = 0x8000, scoped, tag = 'input window, operand 5, single buffered']
    #allocation9 [shape = 's32[1]{0}', space=sflag, size = 0x4, scoped, tag = 'scoped memory for tpu_custom_call.1']
    #allocation10 [shape = 'u8[8192]{0}', space=vmem, size = 0x2000, scoped, tag = 'output window, operand 0, single buffered']
    %12 = vsyncpa [#allocation3], 0
    %13 = vsyncpa [#allocation6], 0
    %14 = vsyncpa [#allocation9], 0
    %15 = vsyncpa [#allocation4], 0
    // Predicated region
    $region2: #{tpu_custom_call.1} parent=1 // pred_check
      _
    $region3: #{tpu_custom_call.1} parent=1 // pred_check_branch
      %17 = sbr.rel (0) target = $region5
    $region4: #{tpu_custom_call.1} parent=1 // pred_region
      _
    $region5: #{tpu_custom_call.1} parent=1 // pred_fallthru
      _
    // Predicated region
    $region6: #{tpu_custom_call.1} parent=1 // pred_check
      _
    $region7: #{tpu_custom_call.1} parent=1 // pred_check_branch
      %19 = sbr.rel (0) target = $region9
    $region8: #{tpu_custom_call.1} parent=1 // pred_region
      _
    $region9: #{tpu_custom_call.1} parent=1 // pred_fallthru
      _
    // Predicated region
    $region10: #{tpu_custom_call.1} parent=1 // pred_check
      _
    $region11: #{tpu_custom_call.1} parent=1 // pred_check_branch
      %21 = sbr.rel (0) target = $region13
    $region12: #{tpu_custom_call.1} parent=1 // pred_region
      %s23 = ssub.s32 1024, 1024
      %24 = vsyncadd [#allocation3], %s23
      %s25 = sshll.u32 [#allocation2], 4
      %s26 = int_to_ptr.vmem [resolvable:$true] %s25
      %31 = dma.hbm_to_vmem [thread:$0]  %s2, 1024, %s26, [#allocation3], 128, 128, 8
    $region13: #{tpu_custom_call.1} parent=1 // pred_fallthru
      _
    // Predicated region
    $region14: #{tpu_custom_call.1} parent=1 // pred_check
      _
    $region15: #{tpu_custom_call.1} parent=1 // pred_check_branch
      %33 = sbr.rel (0) target = $region17
    $region16: #{tpu_custom_call.1} parent=1 // pred_region
      %s35 = ssub.s32 1024, 1024
      %36 = vsyncadd [#allocation6], %s35
      %s37 = sshll.u32 [#allocation5], 4
      %s38 = int_to_ptr.vmem [resolvable:$true] %s37
      %43 = dma.hbm_to_vmem [thread:$0]  %s3, 1024, %s38, [#allocation6], 128, 128, 8
    $region17: #{tpu_custom_call.1} parent=1 // pred_fallthru
      _
    // Predicated region
    $region18: #{tpu_custom_call.1} parent=1 // pred_check
      _
    $region19: #{tpu_custom_call.1} parent=1 // pred_check_branch
      %45 = sbr.rel (0) target = $region21
    $region20: #{tpu_custom_call.1} parent=1 // pred_region
      %s47 = ssub.s32 1024, 1024
      %48 = vsyncadd [#allocation6], %s47
      %s49 = sshll.u32 [#allocation7], 4
      %s50 = int_to_ptr.vmem [resolvable:$true] %s49
      %55 = dma.hbm_to_vmem [thread:$0]  %s4, 1024, %s50, [#allocation6], 128, 128, 8
    $region21: #{tpu_custom_call.1} parent=1 // pred_fallthru
      _
    // Predicated region
    $region22: #{tpu_custom_call.1} parent=1 // pred_check
      _
    $region23: #{tpu_custom_call.1} parent=1 // pred_check_branch
      %57 = sbr.rel (0) target = $region25
    $region24: #{tpu_custom_call.1} parent=1 // pred_region
      %s59 = ssub.s32 1024, 1024
      %60 = vsyncadd [#allocation9], %s59
      %s61 = sshll.u32 [#allocation8], 4
      %s62 = int_to_ptr.vmem [resolvable:$true] %s61
      %67 = dma.hbm_to_vmem [thread:$0]  %s5, 1024, %s62, [#allocation9], 128, 128, 8
    $region25: #{tpu_custom_call.1} parent=1 // pred_fallthru
      _
    // Predicated region
    $region26: #{tpu_custom_call.1} parent=1 // pred_check
      _
    $region27: #{tpu_custom_call.1} parent=1 // pred_check_branch
      %69 = sbr.rel (0) target = $region29
    $region28: #{tpu_custom_call.1} parent=1 // pred_region
      _
    $region29: #{tpu_custom_call.1} parent=1 // pred_fallthru
      _
    // Predicated region
    $region30: #{tpu_custom_call.1} parent=1 // pred_check
      _
    $region31: #{tpu_custom_call.1} parent=1 // pred_check_branch
      %71 = sbr.rel (0) target = $region33
    $region32: #{tpu_custom_call.1} parent=1 // pred_region
      %72 = dma.done [#allocation3], 1024
    $region33: #{tpu_custom_call.1} parent=1 // pred_fallthru
      _
    // Predicated region
    $region34: #{tpu_custom_call.1} parent=1 // pred_check
      _
    $region35: #{tpu_custom_call.1} parent=1 // pred_check_branch
      %74 = sbr.rel (0) target = $region37
    $region36: #{tpu_custom_call.1} parent=1 // pred_region
      %75 = dma.done [#allocation6], 1024
    $region37: #{tpu_custom_call.1} parent=1 // pred_fallthru
      _
    // Predicated region
    $region38: #{tpu_custom_call.1} parent=1 // pred_check
      _
    $region39: #{tpu_custom_call.1} parent=1 // pred_check_branch
      %77 = sbr.rel (0) target = $region41
    $region40: #{tpu_custom_call.1} parent=1 // pred_region
      %78 = dma.done [#allocation6], 1024
    $region41: #{tpu_custom_call.1} parent=1 // pred_fallthru
      _
    // Predicated region
    $region42: #{tpu_custom_call.1} parent=1 // pred_check
      _
    $region43: #{tpu_custom_call.1} parent=1 // pred_check_branch
      %80 = sbr.rel (0) target = $region45
    $region44: #{tpu_custom_call.1} parent=1 // pred_region
      %81 = dma.done [#allocation9], 1024
    $region45: #{tpu_custom_call.1} parent=1 // pred_fallthru
      _
    %v82 = vld [vmem:[%s0] sm:$0xff]
    %v83 = vld [vmem:[%s0 + $0x8] sm:$0xff]
    %v84 = vld [vmem:[%s1] sm:$0xf]
    %v85 = vld [vmem:[#allocation2] sm:$0xff]
    %v86 = vld [vmem:[#allocation2 + $0x8] sm:$0xff]
    %v87 = vld [vmem:[#allocation2 + $0x10] sm:$0xff]
    %v88 = vld [vmem:[#allocation2 + $0x18] sm:$0xff]
    %v89 = vld [vmem:[#allocation2 + $0x20] sm:$0xff]
    %v90 = vld [vmem:[#allocation2 + $0x28] sm:$0xff]
    %v91 = vld [vmem:[#allocation2 + $0x30] sm:$0xff]
    %v92 = vld [vmem:[#allocation2 + $0x38] sm:$0xff]
    %v93 = vld [vmem:[#allocation5] sm:$0xff]
    %v94 = vld [vmem:[#allocation5 + $0x8] sm:$0xff]
    %v95 = vld [vmem:[#allocation5 + $0x10] sm:$0xff]
    %v96 = vld [vmem:[#allocation5 + $0x18] sm:$0xff]
    %v97 = vld [vmem:[#allocation5 + $0x20] sm:$0xff]
    %v98 = vld [vmem:[#allocation5 + $0x28] sm:$0xff]
    %v99 = vld [vmem:[#allocation5 + $0x30] sm:$0xff]
    %v100 = vld [vmem:[#allocation5 + $0x38] sm:$0xff]
    %v101 = vld [vmem:[#allocation7] sm:$0xff]
    %v102 = vld [vmem:[#allocation7 + $0x8] sm:$0xff]
    %v103 = vld [vmem:[#allocation7 + $0x10] sm:$0xff]
    %v104 = vld [vmem:[#allocation7 + $0x18] sm:$0xff]
    %v105 = vld [vmem:[#allocation7 + $0x20] sm:$0xff]
    %v106 = vld [vmem:[#allocation7 + $0x28] sm:$0xff]
    %v107 = vld [vmem:[#allocation7 + $0x30] sm:$0xff]
    %v108 = vld [vmem:[#allocation7 + $0x38] sm:$0xff]
    %v109 = vld [vmem:[#allocation8] sm:$0xff]
    %v110 = vld [vmem:[#allocation8 + $0x8] sm:$0xff]
    %v111 = vld [vmem:[#allocation8 + $0x10] sm:$0xff]
    %v112 = vld [vmem:[#allocation8 + $0x18] sm:$0xff]
    %v113 = vld [vmem:[#allocation8 + $0x20] sm:$0xff]
    %v114 = vld [vmem:[#allocation8 + $0x28] sm:$0xff]
    %v115 = vld [vmem:[#allocation8 + $0x30] sm:$0xff]
    %v116 = vld [vmem:[#allocation8 + $0x38] sm:$0xff]
    %v117 = vld [vmem:[%s6] sm:$0x1]
    %v118 = vld [vmem:[%s6 + $0x1] sm:$0x1]
    %v119 = vld [vmem:[%s6 + $0x2] sm:$0x1]
    %v120 = vld [vmem:[%s6 + $0x3] sm:$0x1]
    %v121 = vlaneseq
    %v122 = vshrl.u32 %v121, 7
    %v123 = vsub.s32 0, %v122
    %v124 = vrot.slane %v117, %v123
    %vm125 = vcmask 31744
    %v127 = vsel %vm125, %v82, 0
    %v130 = vsel %vm125, %v83, 0
    %vm132 = vcmask 1043456
    %v134 = vsel %vm132, %v84, 0
    %136 = vmatprep.subr.mxu0 0.0
    %137 = vmatpush1.msra.mxu0 %v134
    %138 = vmatprep.subr.mxu0 0.0
    %139 = vmatpush1.msra.mxu0 0.0
    %140 = vmatprep.subr.mxu0 0.0
    %141 = vmatpush1.msra.mxu0 0.0
    %142 = vmatprep.subr.mxu0 0.0
    %143 = vmatpush1.msra.mxu0 0.0
    %144 = vmatprep.subr.mxu0 0.0
    %145 = vmatpush1.msra.mxu0 0.0
    %146 = vmatprep.subr.mxu0 0.0
    %147 = vmatpush1.msra.mxu0 0.0
    %148 = vmatprep.subr.mxu0 0.0
    %149 = vmatpush1.msra.mxu0 0.0
    %150 = vmatprep.subr.mxu0 0.0
    %151 = vmatpush1.msra.mxu0 0.0
    %152 = vmatprep.subr.mxu0 0.0
    %153 = vmatpush1.msra.mxu0 0.0
    %154 = vmatprep.subr.mxu0 0.0
    %155 = vmatpush1.msra.mxu0 0.0
    %156 = vmatprep.subr.mxu0 0.0
    %157 = vmatpush1.msra.mxu0 0.0
    %158 = vmatprep.subr.mxu0 0.0
    %159 = vmatpush1.msra.mxu0 0.0
    %160 = vmatprep.subr.mxu0 0.0
    %161 = vmatpush1.msra.mxu0 0.0
    %162 = vmatprep.subr.mxu0 0.0
    %163 = vmatpush1.msra.mxu0 0.0
    %164 = vmatprep.subr.mxu0 0.0
    %165 = vmatpush1.msra.mxu0 0.0
    %166 = vmatprep.subr.mxu0 0.0
    %167 = vmatpush1.msra.mxu0 0.0
    %168 = vmatprep.subr.mxu0 0.0
    %169 = vmatpush1.msra.mxu0 0.0
    %170 = vmatprep.subr.mxu0 0.0
    %171 = vmatpush1.msra.mxu0 0.0
    %172 = vmatprep.subr.mxu0 0.0
    %173 = vmatpush1.msra.mxu0 0.0
    %174 = vmatprep.subr.mxu0 0.0
    %175 = vmatpush1.msra.mxu0 0.0
    %176 = vmatprep.subr.mxu0 0.0
    %177 = vmatpush1.msra.mxu0 0.0
    %178 = vmatprep.subr.mxu0 0.0
    %179 = vmatpush1.msra.mxu0 0.0
    %180 = vmatprep.subr.mxu0 0.0
    %181 = vmatpush1.msra.mxu0 0.0
    %182 = vmatprep.subr.mxu0 0.0
    %183 = vmatpush1.msra.mxu0 0.0
    %184 = vmatprep.subr.mxu0 0.0
    %185 = vmatpush1.msra.mxu0 0.0
    %186 = vmatprep.subr.mxu0 0.0
    %187 = vmatpush1.msra.mxu0 0.0
    %188 = vmatprep.subr.mxu0 0.0
    %189 = vmatpush1.msra.mxu0 0.0
    %190 = vmatprep.subr.mxu0 0.0
    %191 = vmatpush1.msra.mxu0 0.0
    %192 = vmatprep.subr.mxu0 0.0
    %193 = vmatpush1.msra.mxu0 0.0
    %194 = vmatprep.subr.mxu0 0.0
    %195 = vmatpush1.msra.mxu0 0.0
    %196 = vmatprep.subr.mxu0 0.0
    %197 = vmatpush1.msra.mxu0 0.0
    %198 = vmatprep.subr.mxu0 0.0
    %199 = vmatpush1.msra.mxu0 0.0
    %200 = vmatprep.mubr.f32.mxu0 0.0
    %201 = vmatmul.mubr.f32.gmra.mrb[0].mxu0 %v127
    %v202 = vpop.f32.mrb[0].mxu0
    %v203 = vadd.f32 %v124, %v202
    %v204 = vpop.f32.mrb[0].mxu0
    %205 = vmatprep.mubr.f32.mxu0 0.0
    %206 = vmatmul.mubr.f32.gmra.mrb[0].mxu0 %v130
    %v207 = vpop.f32.mrb[0].mxu0
    %v208 = vadd.f32 %v124, %v207
    %v209 = vpop.f32.mrb[0].mxu0
    %210 = vdwg.mxu0
    %v211 = vmin.f32 %v203, 0.0
    %v212 = vmin.f32 %v208, 0.0
    %v213 = vmul.f32 %v211, 1.442695
    %v214 = vpow.pop %v213
    %v215 = vmul.f32 %v212, 1.442695
    %v216 = vpow.pop %v215
    %vm217 = vcmp.gt.f32.partialorder %v203, 0.0
    %vm218 = vcmp.gt.f32.partialorder %v208, 0.0
    %v219 = vsub.f32 %v214, 1.0
    %v220 = vsub.f32 %v216, 1.0
    %v221 = vsel %vm217, %v203, %v219
    %v222 = vsel %vm218, %v208, %v220
    %v223 = vsel %vm217, 1.0, %v214
    %v224 = vsel %vm218, 1.0, %v216
    %v225 = vlaneseq
    %v226 = vshrl.u32 %v225, 7
    %v227 = vsub.s32 0, %v226
    %v228 = vrot.slane %v118, %v227
    %vm229 = vcmask 523264
    %v231 = vsel %vm229, %v221, 0
    %v234 = vsel %vm229, %v222, 0
    %236 = vmatprep.subr.mxu0 0.0
    %237 = vmatpush1.msra.mxu0 %v85
    %238 = vmatprep.subr.mxu0 0.0
    %239 = vmatpush1.msra.mxu0 %v86
    %240 = vmatprep.subr.mxu0 0.0
    %241 = vmatpush1.msra.mxu0 %v87
    %242 = vmatprep.subr.mxu0 0.0
    %243 = vmatpush1.msra.mxu0 %v88
    %244 = vmatprep.subr.mxu0 0.0
    %245 = vmatpush1.msra.mxu0 %v89
    %246 = vmatprep.subr.mxu0 0.0
    %247 = vmatpush1.msra.mxu0 %v90
    %248 = vmatprep.subr.mxu0 0.0
    %249 = vmatpush1.msra.mxu0 %v91
    %250 = vmatprep.subr.mxu0 0.0
    %251 = vmatpush1.msra.mxu0 %v92
    %252 = vmatprep.subr.mxu0 0.0
    %253 = vmatpush1.msra.mxu0 0.0
    %254 = vmatprep.subr.mxu0 0.0
    %255 = vmatpush1.msra.mxu0 0.0
    %256 = vmatprep.subr.mxu0 0.0
    %257 = vmatpush1.msra.mxu0 0.0
    %258 = vmatprep.subr.mxu0 0.0
    %259 = vmatpush1.msra.mxu0 0.0
    %260 = vmatprep.subr.mxu0 0.0
    %261 = vmatpush1.msra.mxu0 0.0
    %262 = vmatprep.subr.mxu0 0.0
    %263 = vmatpush1.msra.mxu0 0.0
    %264 = vmatprep.subr.mxu0 0.0
    %265 = vmatpush1.msra.mxu0 0.0
    %266 = vmatprep.subr.mxu0 0.0
    %267 = vmatpush1.msra.mxu0 0.0
    %268 = vmatprep.subr.mxu0 0.0
    %269 = vmatpush1.msra.mxu0 0.0
    %270 = vmatprep.subr.mxu0 0.0
    %271 = vmatpush1.msra.mxu0 0.0
    %272 = vmatprep.subr.mxu0 0.0
    %273 = vmatpush1.msra.mxu0 0.0
    %274 = vmatprep.subr.mxu0 0.0
    %275 = vmatpush1.msra.mxu0 0.0
    %276 = vmatprep.subr.mxu0 0.0
    %277 = vmatpush1.msra.mxu0 0.0
    %278 = vmatprep.subr.mxu0 0.0
    %279 = vmatpush1.msra.mxu0 0.0
    %280 = vmatprep.subr.mxu0 0.0
    %281 = vmatpush1.msra.mxu0 0.0
    %282 = vmatprep.subr.mxu0 0.0
    %283 = vmatpush1.msra.mxu0 0.0
    %284 = vmatprep.subr.mxu0 0.0
    %285 = vmatpush1.msra.mxu0 0.0
    %286 = vmatprep.subr.mxu0 0.0
    %287 = vmatpush1.msra.mxu0 0.0
    %288 = vmatprep.subr.mxu0 0.0
    %289 = vmatpush1.msra.mxu0 0.0
    %290 = vmatprep.subr.mxu0 0.0
    %291 = vmatpush1.msra.mxu0 0.0
    %292 = vmatprep.subr.mxu0 0.0
    %293 = vmatpush1.msra.mxu0 0.0
    %294 = vmatprep.subr.mxu0 0.0
    %295 = vmatpush1.msra.mxu0 0.0
    %296 = vmatprep.subr.mxu0 0.0
    %297 = vmatpush1.msra.mxu0 0.0
    %298 = vmatprep.subr.mxu0 0.0
    %299 = vmatpush1.msra.mxu0 0.0
    %300 = vmatprep.mubr.f32.mxu0 0.0
    %301 = vmatmul.mubr.f32.gmra.mrb[0].mxu0 %v231
    %v302 = vpop.f32.mrb[0].mxu0
    %v303 = vadd.f32 %v228, %v302
    %v304 = vpop.f32.mrb[0].mxu0
    %305 = vmatprep.mubr.f32.mxu0 0.0
    %306 = vmatmul.mubr.f32.gmra.mrb[0].mxu0 %v234
    %v307 = vpop.f32.mrb[0].mxu0
    %v308 = vadd.f32 %v228, %v307
    %v309 = vpop.f32.mrb[0].mxu0
    %310 = vdwg.mxu0
    %v311 = vmin.f32 %v303, 0.0
    %v312 = vmin.f32 %v308, 0.0
    %v313 = vmul.f32 %v311, 1.442695
    %v314 = vpow.pop %v313
    %v315 = vmul.f32 %v312, 1.442695
    %v316 = vpow.pop %v315
    %vm317 = vcmp.gt.f32.partialorder %v303, 0.0
    %vm318 = vcmp.gt.f32.partialorder %v308, 0.0
    %v319 = vsub.f32 %v314, 1.0
    %v320 = vsub.f32 %v316, 1.0
    %v321 = vsel %vm317, %v303, %v319
    %v322 = vsel %vm318, %v308, %v320
    %v323 = vsel %vm317, 1.0, %v314
    %v324 = vsel %vm318, 1.0, %v316
    %v325 = vlaneseq
    %v326 = vshrl.u32 %v325, 7
    %v327 = vsub.s32 0, %v326
    %v328 = vrot.slane %v119, %v327
    %v329 = vmul.f32 %v328, %v323
    %v330 = vmul.f32 %v328, %v324
    %v332 = vsel %vm229, %v329, 0
    %v335 = vsel %vm229, %v330, 0
    %337 = vmatprep.subr.mxu0 0.0
    %338 = vmatpush1.msra.mxu0 %v93
    %339 = vmatprep.subr.mxu0 0.0
    %340 = vmatpush1.msra.mxu0 %v94
    %341 = vmatprep.subr.mxu0 0.0
    %342 = vmatpush1.msra.mxu0 %v95
    %343 = vmatprep.subr.mxu0 0.0
    %344 = vmatpush1.msra.mxu0 %v96
    %345 = vmatprep.subr.mxu0 0.0
    %346 = vmatpush1.msra.mxu0 %v97
    %347 = vmatprep.subr.mxu0 0.0
    %348 = vmatpush1.msra.mxu0 %v98
    %349 = vmatprep.subr.mxu0 0.0
    %350 = vmatpush1.msra.mxu0 %v99
    %351 = vmatprep.subr.mxu0 0.0
    %352 = vmatpush1.msra.mxu0 %v100
    %353 = vmatprep.subr.mxu0 0.0
    %354 = vmatpush1.msra.mxu0 0.0
    %355 = vmatprep.subr.mxu0 0.0
    %356 = vmatpush1.msra.mxu0 0.0
    %357 = vmatprep.subr.mxu0 0.0
    %358 = vmatpush1.msra.mxu0 0.0
    %359 = vmatprep.subr.mxu0 0.0
    %360 = vmatpush1.msra.mxu0 0.0
    %361 = vmatprep.subr.mxu0 0.0
    %362 = vmatpush1.msra.mxu0 0.0
    %363 = vmatprep.subr.mxu0 0.0
    %364 = vmatpush1.msra.mxu0 0.0
    %365 = vmatprep.subr.mxu0 0.0
    %366 = vmatpush1.msra.mxu0 0.0
    %367 = vmatprep.subr.mxu0 0.0
    %368 = vmatpush1.msra.mxu0 0.0
    %369 = vmatprep.subr.mxu0 0.0
    %370 = vmatpush1.msra.mxu0 0.0
    %371 = vmatprep.subr.mxu0 0.0
    %372 = vmatpush1.msra.mxu0 0.0
    %373 = vmatprep.subr.mxu0 0.0
    %374 = vmatpush1.msra.mxu0 0.0
    %375 = vmatprep.subr.mxu0 0.0
    %376 = vmatpush1.msra.mxu0 0.0
    %377 = vmatprep.subr.mxu0 0.0
    %378 = vmatpush1.msra.mxu0 0.0
    %379 = vmatprep.subr.mxu0 0.0
    %380 = vmatpush1.msra.mxu0 0.0
    %381 = vmatprep.subr.mxu0 0.0
    %382 = vmatpush1.msra.mxu0 0.0
    %383 = vmatprep.subr.mxu0 0.0
    %384 = vmatpush1.msra.mxu0 0.0
    %385 = vmatprep.subr.mxu0 0.0
    %386 = vmatpush1.msra.mxu0 0.0
    %387 = vmatprep.subr.mxu0 0.0
    %388 = vmatpush1.msra.mxu0 0.0
    %389 = vmatprep.subr.mxu0 0.0
    %390 = vmatpush1.msra.mxu0 0.0
    %391 = vmatprep.subr.mxu0 0.0
    %392 = vmatpush1.msra.mxu0 0.0
    %393 = vmatprep.subr.mxu0 0.0
    %394 = vmatpush1.msra.mxu0 0.0
    %395 = vmatprep.subr.mxu0 0.0
    %396 = vmatpush1.msra.mxu0 0.0
    %397 = vmatprep.subr.mxu0 0.0
    %398 = vmatpush1.msra.mxu0 0.0
    %399 = vmatprep.subr.mxu0 0.0
    %400 = vmatpush1.msra.mxu0 0.0
    %401 = vmatprep.mubr.f32.mxu0 0.0
    %402 = vmatmul.mubr.f32.gmra.mrb[0].mxu0 %v332
    %v403 = vpop.f32.mrb[0].mxu0
    %v404 = vadd.f32 0.0, %v403
    %v405 = vpop.f32.mrb[0].mxu0
    %406 = vmatprep.mubr.f32.mxu0 0.0
    %407 = vmatmul.mubr.f32.gmra.mrb[0].mxu0 %v335
    %v408 = vpop.f32.mrb[0].mxu0
    %v409 = vadd.f32 0.0, %v408
    %v410 = vpop.f32.mrb[0].mxu0
    %411 = vdwg.mxu0
    %v412 = vmul.f32 %v404, %v223
    %v413 = vmul.f32 %v409, %v224
    %v415 = vsel %vm229, %v412, 0
    %v418 = vsel %vm229, %v413, 0
    %420 = vmatprep.subr.mxu0 0.0
    %421 = vmatpush1.msra.mxu0 %v109
    %422 = vmatprep.subr.mxu0 0.0
    %423 = vmatpush1.msra.mxu0 %v110
    %424 = vmatprep.subr.mxu0 0.0
    %425 = vmatpush1.msra.mxu0 %v111
    %426 = vmatprep.subr.mxu0 0.0
    %427 = vmatpush1.msra.mxu0 %v112
    %428 = vmatprep.subr.mxu0 0.0
    %429 = vmatpush1.msra.mxu0 %v113
    %430 = vmatprep.subr.mxu0 0.0
    %431 = vmatpush1.msra.mxu0 %v114
    %432 = vmatprep.subr.mxu0 0.0
    %433 = vmatpush1.msra.mxu0 %v115
    %434 = vmatprep.subr.mxu0 0.0
    %435 = vmatpush1.msra.mxu0 %v116
    %436 = vmatprep.subr.mxu0 0.0
    %437 = vmatpush1.msra.mxu0 0.0
    %438 = vmatprep.subr.mxu0 0.0
    %439 = vmatpush1.msra.mxu0 0.0
    %440 = vmatprep.subr.mxu0 0.0
    %441 = vmatpush1.msra.mxu0 0.0
    %442 = vmatprep.subr.mxu0 0.0
    %443 = vmatpush1.msra.mxu0 0.0
    %444 = vmatprep.subr.mxu0 0.0
    %445 = vmatpush1.msra.mxu0 0.0
    %446 = vmatprep.subr.mxu0 0.0
    %447 = vmatpush1.msra.mxu0 0.0
    %448 = vmatprep.subr.mxu0 0.0
    %449 = vmatpush1.msra.mxu0 0.0
    %450 = vmatprep.subr.mxu0 0.0
    %451 = vmatpush1.msra.mxu0 0.0
    %452 = vmatprep.subr.mxu0 0.0
    %453 = vmatpush1.msra.mxu0 0.0
    %454 = vmatprep.subr.mxu0 0.0
    %455 = vmatpush1.msra.mxu0 0.0
    %456 = vmatprep.subr.mxu0 0.0
    %457 = vmatpush1.msra.mxu0 0.0
    %458 = vmatprep.subr.mxu0 0.0
    %459 = vmatpush1.msra.mxu0 0.0
    %460 = vmatprep.subr.mxu0 0.0
    %461 = vmatpush1.msra.mxu0 0.0
    %462 = vmatprep.subr.mxu0 0.0
    %463 = vmatpush1.msra.mxu0 0.0
    %464 = vmatprep.subr.mxu0 0.0
    %465 = vmatpush1.msra.mxu0 0.0
    %466 = vmatprep.subr.mxu0 0.0
    %467 = vmatpush1.msra.mxu0 0.0
    %468 = vmatprep.subr.mxu0 0.0
    %469 = vmatpush1.msra.mxu0 0.0
    %470 = vmatprep.subr.mxu0 0.0
    %471 = vmatpush1.msra.mxu0 0.0
    %472 = vmatprep.subr.mxu0 0.0
    %473 = vmatpush1.msra.mxu0 0.0
    %474 = vmatprep.subr.mxu0 0.0
    %475 = vmatpush1.msra.mxu0 0.0
    %476 = vmatprep.subr.mxu0 0.0
    %477 = vmatpush1.msra.mxu0 0.0
    %478 = vmatprep.subr.mxu0 0.0
    %479 = vmatpush1.msra.mxu0 0.0
    %480 = vmatprep.subr.mxu0 0.0
    %481 = vmatpush1.msra.mxu0 0.0
    %482 = vmatprep.subr.mxu0 0.0
    %483 = vmatpush1.msra.mxu0 0.0
    %484 = vmatprep.mubr.f32.mxu0 0.0
    %485 = vmatmul.mubr.f32.gmra.mrb[0].mxu0 %v415
    %v486 = vpop.f32.mrb[0].mxu0
    %v487 = vadd.f32 0.0, %v486
    %v488 = vpop.f32.mrb[0].mxu0
    %489 = vmatprep.mubr.f32.mxu0 0.0
    %490 = vmatmul.mubr.f32.gmra.mrb[0].mxu0 %v418
    %v491 = vpop.f32.mrb[0].mxu0
    %v492 = vadd.f32 0.0, %v491
    %v493 = vpop.f32.mrb[0].mxu0
    %494 = vdwg.mxu0
    %v496 = vsel %vm229, %v321, 0
    %v499 = vsel %vm229, %v322, 0
    %501 = vmatprep.subr.mxu0 0.0
    %502 = vmatpush1.msra.mxu0 %v101
    %503 = vmatprep.subr.mxu0 0.0
    %504 = vmatpush1.msra.mxu0 %v102
    %505 = vmatprep.subr.mxu0 0.0
    %506 = vmatpush1.msra.mxu0 %v103
    %507 = vmatprep.subr.mxu0 0.0
    %508 = vmatpush1.msra.mxu0 %v104
    %509 = vmatprep.subr.mxu0 0.0
    %510 = vmatpush1.msra.mxu0 %v105
    %511 = vmatprep.subr.mxu0 0.0
    %512 = vmatpush1.msra.mxu0 %v106
    %513 = vmatprep.subr.mxu0 0.0
    %514 = vmatpush1.msra.mxu0 %v107
    %515 = vmatprep.subr.mxu0 0.0
    %516 = vmatpush1.msra.mxu0 %v108
    %517 = vmatprep.subr.mxu0 0.0
    %518 = vmatpush1.msra.mxu0 0.0
    %519 = vmatprep.subr.mxu0 0.0
    %520 = vmatpush1.msra.mxu0 0.0
    %521 = vmatprep.subr.mxu0 0.0
    %522 = vmatpush1.msra.mxu0 0.0
    %523 = vmatprep.subr.mxu0 0.0
    %524 = vmatpush1.msra.mxu0 0.0
    %525 = vmatprep.subr.mxu0 0.0
    %526 = vmatpush1.msra.mxu0 0.0
    %527 = vmatprep.subr.mxu0 0.0
    %528 = vmatpush1.msra.mxu0 0.0
    %529 = vmatprep.subr.mxu0 0.0
    %530 = vmatpush1.msra.mxu0 0.0
    %531 = vmatprep.subr.mxu0 0.0
    %532 = vmatpush1.msra.mxu0 0.0
    %533 = vmatprep.subr.mxu0 0.0
    %534 = vmatpush1.msra.mxu0 0.0
    %535 = vmatprep.subr.mxu0 0.0
    %536 = vmatpush1.msra.mxu0 0.0
    %537 = vmatprep.subr.mxu0 0.0
    %538 = vmatpush1.msra.mxu0 0.0
    %539 = vmatprep.subr.mxu0 0.0
    %540 = vmatpush1.msra.mxu0 0.0
    %541 = vmatprep.subr.mxu0 0.0
    %542 = vmatpush1.msra.mxu0 0.0
    %543 = vmatprep.subr.mxu0 0.0
    %544 = vmatpush1.msra.mxu0 0.0
    %545 = vmatprep.subr.mxu0 0.0
    %546 = vmatpush1.msra.mxu0 0.0
    %547 = vmatprep.subr.mxu0 0.0
    %548 = vmatpush1.msra.mxu0 0.0
    %549 = vmatprep.subr.mxu0 0.0
    %550 = vmatpush1.msra.mxu0 0.0
    %551 = vmatprep.subr.mxu0 0.0
    %552 = vmatpush1.msra.mxu0 0.0
    %553 = vmatprep.subr.mxu0 0.0
    %554 = vmatpush1.msra.mxu0 0.0
    %555 = vmatprep.subr.mxu0 0.0
    %556 = vmatpush1.msra.mxu0 0.0
    %557 = vmatprep.subr.mxu0 0.0
    %558 = vmatpush1.msra.mxu0 0.0
    %559 = vmatprep.subr.mxu0 0.0
    %560 = vmatpush1.msra.mxu0 0.0
    %561 = vmatprep.subr.mxu0 0.0
    %562 = vmatpush1.msra.mxu0 0.0
    %563 = vmatprep.subr.mxu0 0.0
    %564 = vmatpush1.msra.mxu0 0.0
    %565 = vmatprep.mubr.f32.mxu0 0.0
    %566 = vmatmul.mubr.f32.gmra.mrb[0].mxu0 %v496
    %v567 = vpop.f32.mrb[0].mxu0
    %v568 = vadd.f32 %v487, %v567
    %v569 = vpop.f32.mrb[0].mxu0
    %570 = vmatprep.mubr.f32.mxu0 0.0
    %571 = vmatmul.mubr.f32.gmra.mrb[0].mxu0 %v499
    %v572 = vpop.f32.mrb[0].mxu0
    %v573 = vadd.f32 %v492, %v572
    %v574 = vpop.f32.mrb[0].mxu0
    %575 = vdwg.mxu0
    %v576 = vlaneseq
    %v577 = vshrl.u32 %v576, 7
    %v578 = vsub.s32 0, %v577
    %v579 = vrot.slane %v120, %v578
    %v580 = vadd.f32 %v568, %v579
    %v581 = vadd.f32 %v573, %v579
    %582 = vst [vmem:[#allocation10] sm:$0xff] %v580
    %583 = vst [vmem:[#allocation10 + $0x8] sm:$0xff] %v581
    // Predicated region
    $region46: #{tpu_custom_call.1} parent=1 // pred_check
      _
    $region47: #{tpu_custom_call.1} parent=1 // pred_check_branch
      %585 = sbr.rel (0) target = $region49
    $region48: #{tpu_custom_call.1} parent=1 // pred_region
      %s587 = ssub.s32 256, 256
      %588 = vsyncadd [#allocation4], %s587
      %s589 = sshll.u32 [#allocation10], 4
      %s590 = int_to_ptr.vmem [resolvable:$true] %s589
      %595 = dma.vmem_to_hbm [thread:$0]  %s590, 256, %s7, [#allocation4], 128, 128, 8
    $region49: #{tpu_custom_call.1} parent=1 // pred_fallthru
      _
    // Predicated region
    $region50: #{tpu_custom_call.1} parent=1 // pred_check
      _
    $region51: #{tpu_custom_call.1} parent=1 // pred_check_branch
      %597 = sbr.rel (0) target = $region53
    $region52: #{tpu_custom_call.1} parent=1 // pred_region
      %598 = dma.done [#allocation4], 256
    $region53: #{tpu_custom_call.1} parent=1 // pred_fallthru
      _
    %599 = vsyncpa [#allocation3], 1
    %600 = vsyncpa [#allocation6], 1
    %601 = vsyncpa [#allocation9], 1
    %602 = vsyncpa [#allocation4], 1

</llo_original>
